<compile_context>
chip_gen: v6e
topology: v6e:2x2x1
jax: 0.10.0
libtpu: 0.0.40
codegen_flags: <defaults>
</compile_context>

<pallas_src>
import jax
import jax.numpy as jnp
from jax.experimental import pallas as pl
from jax.experimental.pallas import tpu as pltpu

EPS = 1e-8  # matches the `+ 1e-8` in make_unit_var


def _input_norm_kernel(x_ref, o_ref):
    # x_ref / o_ref: (TN, D) tile — TN samples, full feature row each.
    x = x_ref[...].astype(jnp.float32)
    d = x.shape[-1]

    # Fused single-pass statistics: sum and sum-of-squares together.
    s1 = jnp.sum(x, axis=-1, keepdims=True)
    s2 = jnp.sum(x * x, axis=-1, keepdims=True)
    mean = s1 * (1.0 / d)

    # Unbiased variance of (x - mean): (sumsq - d*mean^2) / (d - 1).
    var = (s2 - d * mean * mean) * (1.0 / (d - 1))
    var = jnp.maximum(var, 0.0)            # guard tiny negatives from cancellation
    std = jnp.sqrt(var)

    inv = pl.reciprocal(std + EPS, approx=False)   # eps added to std (torch semantics)
    o_ref[...] = ((x - mean) * inv).astype(o_ref.dtype)


def _row_multiple(dtype):
    itemsize = jnp.dtype(dtype).itemsize
    if itemsize == 2:
        return 16   # bf16 packs 2 rows per sublane
    if itemsize == 1:
        return 32
    return 8        # f32


def _vmem_capacity_bytes():
    try:
        return int(pltpu.get_tpu_info().vmem_capacity_bytes)
    except Exception:
        return 64 << 20   # conservative (v7x per-TC VMEM)


def _choose_tile_rows(N, D, dtype):
    """Pick how many sample-rows each grid step processes."""
    itemsize = jnp.dtype(dtype).itemsize
    row_mult = _row_multiple(dtype)

    # Tiny problems: one block covering everything (full-dim block is always legal).
    if N * D * itemsize <= (4 << 20):
        return N

    vmem_cap = _vmem_capacity_bytes()
    # Per-row VMEM cost: double-buffered input + output pipeline buffers
    # (2 bufs * 2 arrays) plus ~2 f32-sized compute temporaries.
    per_row = 4 * D * itemsize + 2 * D * 4
    budget = int(vmem_cap * 0.40)            # headroom for compiler scratch
    tn = max(row_mult, (budget // per_row) // row_mult * row_mult)

    # Keep the grid long enough (>= 4 steps) to shard across TensorCores.
    while tn > row_mult and tn < N and pl.cdiv(N, tn) < 4:
        tn = max(row_mult, (tn // 2) // row_mult * row_mult)

    return N if tn >= N else tn


def input_norm(x, tile_rows=None):
    """x: [N, C, H, W] (NCHW). Returns per-sample zero-mean, unit-(unbiased)std tensor."""
    N, C, H, W = x.shape
    D = C * H * W
    x2d = x.reshape(N, D)
    itemsize = jnp.dtype(x.dtype).itemsize

    tn = tile_rows if tile_rows is not None else _choose_tile_rows(N, D, x.dtype)
    if tn >= N:
        tn = N                                   # full first dim — always legal
    else:
        row_mult = _row_multiple(x.dtype)
        tn = max(row_mult, (tn // row_mult) * row_mult)

    grid = (pl.cdiv(N, tn),)

    # Raise the scoped VMEM limit to comfortably fit the pipelined buffers,
    # capped safely below the chip's physical VMEM (v7x: 64 MiB, v5e/v6e: 128 MiB).
    vmem_cap = _vmem_capacity_bytes()
    needed = 4 * tn * D * itemsize + 3 * tn * D * 4 + (2 << 20)
    vmem_limit = int(min(max(needed, 32 << 20), int(vmem_cap * 0.85)))

    out2d = pl.pallas_call(
        _input_norm_kernel,
        out_shape=jax.ShapeDtypeStruct((N, D), x.dtype),
        grid_spec=pltpu.PrefetchScalarGridSpec(
            num_scalar_prefetch=0,
            grid=grid,
            in_specs=[pl.BlockSpec((tn, D), lambda i: (i, 0))],
            out_specs=pl.BlockSpec((tn, D), lambda i: (i, 0)),
        ),
        compiler_params=pltpu.CompilerParams(
            dimension_semantics=("parallel",),
            vmem_limit_bytes=vmem_limit,
        ),
    )(x2d)

    return out2d.reshape(N, C, H, W)


def _reference(x):
    # Pure-JAX reference mirroring the PyTorch semantics.
    xf = x.astype(jnp.float32)
    mean = jnp.mean(xf, axis=(1, 2, 3), keepdims=True)
    xc = xf - mean
    d = xc[0].size
    var = jnp.sum(xc * xc, axis=(1, 2, 3), keepdims=True) / (d - 1)
    return (xc / (jnp.sqrt(var) + EPS)).astype(x.dtype)


if __name__ == "__main__":
    key = jax.random.PRNGKey(0)
    x = jax.random.normal(key, (2, 4, 16, 16), dtype=jnp.float32) * 3.0 + 1.5

    out = input_norm(x)
    out = jax.block_until_ready(out)

    ref = _reference(x)
    assert out.shape == x.shape and out.dtype == x.dtype
    assert jnp.allclose(out, ref, atol=1e-5, rtol=1e-5), "mismatch vs reference"

    print("KERNEL_OK")
</pallas_src>

<mosaic_0001>
module attributes {stable_mosaic.version = 11 : i64} {
  func.func @_input_norm_kernel(%arg0: i32, %arg1: memref<2x1024xf32, #tpu.memory_space<vmem>>, %arg2: memref<2x1024xf32, #tpu.memory_space<vmem>>) attributes {dimension_semantics = [#tpu.dimension_semantics<parallel>], iteration_bounds = array<i64: 1>, scalar_prefetch = 0 : i64, scratch_operands = 0 : i64, tpu.core_type = #tpu.core_type<tc>, window_params = [{transform_indices = @transform_0, window_bounds = array<i64: 2, 1024>}, {transform_indices = @transform_1, window_bounds = array<i64: 2, 1024>}]} {
    %c0 = arith.constant 0 : index
    %c0_0 = arith.constant 0 : index
    %0 = vector.load %arg1[%c0, %c0_0] : memref<2x1024xf32, #tpu.memory_space<vmem>>, vector<2x1024xf32>
    %cst = arith.constant dense<0.000000e+00> : vector<2xf32>
    %1 = vector.multi_reduction <add>, %0, %cst [1] : vector<2x1024xf32> to vector<2xf32>
    %2 = vector.shape_cast %1 : vector<2xf32> to vector<2x1xf32>
    %3 = arith.mulf %0, %0 : vector<2x1024xf32>
    %cst_1 = arith.constant dense<0.000000e+00> : vector<2xf32>
    %4 = vector.multi_reduction <add>, %3, %cst_1 [1] : vector<2x1024xf32> to vector<2xf32>
    %5 = vector.shape_cast %4 : vector<2xf32> to vector<2x1xf32>
    %cst_2 = arith.constant 9.765625E-4 : f32
    %6 = vector.broadcast %cst_2 : f32 to vector<2x1xf32>
    %7 = arith.mulf %2, %6 : vector<2x1xf32>
    %cst_3 = arith.constant 1.024000e+03 : f32
    %8 = vector.broadcast %cst_3 : f32 to vector<2x1xf32>
    %9 = arith.mulf %8, %7 : vector<2x1xf32>
    %10 = arith.mulf %9, %7 : vector<2x1xf32>
    %11 = arith.subf %5, %10 : vector<2x1xf32>
    %cst_4 = arith.constant 9.77517105E-4 : f32
    %12 = vector.broadcast %cst_4 : f32 to vector<2x1xf32>
    %13 = arith.mulf %11, %12 : vector<2x1xf32>
    %cst_5 = arith.constant 0.000000e+00 : f32
    %14 = vector.broadcast %cst_5 : f32 to vector<2x1xf32>
    %15 = arith.maximumf %13, %14 : vector<2x1xf32>
    %16 = math.sqrt %15 : vector<2x1xf32>
    %cst_6 = arith.constant 9.99999993E-9 : f32
    %17 = vector.broadcast %cst_6 : f32 to vector<2x1xf32>
    %18 = arith.addf %16, %17 : vector<2x1xf32>
    %19 = tpu.reciprocal %18 : vector<2x1xf32> -> vector<2x1xf32>
    %20 = vector.broadcast %7 : vector<2x1xf32> to vector<2x1024xf32>
    %21 = arith.subf %0, %20 : vector<2x1024xf32>
    %22 = vector.broadcast %19 : vector<2x1xf32> to vector<2x1024xf32>
    %23 = arith.mulf %21, %22 : vector<2x1024xf32>
    %c0_7 = arith.constant 0 : index
    %c0_8 = arith.constant 0 : index
    %24 = vector.load %arg2[%c0_7, %c0_8] : memref<2x1024xf32, #tpu.memory_space<vmem>>, vector<2x1024xf32>
    tpu.vector_store %arg2[%c0_7, %c0_8], %23 {strides = array<i32>} : memref<2x1024xf32, #tpu.memory_space<vmem>>, vector<2x1024xf32>,
    return
  }
  func.func @transform_0(%arg0: i32) -> (i32, i32) {
    %c0_i32 = arith.constant 0 : i32
    %c0_i32_0 = arith.constant 0 : i32
    return %arg0, %c0_i32 : i32, i32
  }
  func.func @transform_1(%arg0: i32) -> (i32, i32) {
    %c0_i32 = arith.constant 0 : i32
    %c0_i32_0 = arith.constant 0 : i32
    return %arg0, %c0_i32 : i32, i32
  }
}

</mosaic_0001>

<llo_original>
// kernel: tpu_custom_call.1
$region0: #{tpu_custom_call.1}
  #allocation0 [shape = 'u32[]', space=smem, size = 0x4, offset = 0x4, fixed_abs, tag = 'smem constant byte address 0x4 - core index']
  #allocation1 [shape = 'u32[144,128]{1,0:T(1,128)}', space=vmem, size = 0x12000, scoped, tag = 'internal scratch']
  %s0 = inlined_call_operand.hbm [shape: f32[2,1024], index: 0, kind: input, shape index: {}]
  %s1 = inlined_call_operand.hbm [shape: f32[2,1024], index: 1, kind: output, shape index: {}]
  %s2 = sld [smem:[#allocation0]]
  $region18: #{tpu_custom_call.1} parent=0
    _
  %s4 = ssub.s32 1, %s2
  %s5 = scalar_select 0, %s4, %s2
  $region1: #{tpu_custom_call.1} parent=0
    #allocation2 [shape = 'u8[8192]{0}', space=vmem, size = 0x2000, scoped, tag = 'input window, operand 0, single buffered']
    #allocation3 [shape = 's32[1]{0}', space=sflag, size = 0x4, scoped, tag = 'scoped memory for tpu_custom_call.1']
    #allocation4 [shape = 's32[1]{0}', space=sflag, size = 0x4, scoped, tag = 'scoped memory for tpu_custom_call.1']
    #allocation5 [shape = 'u8[8192]{0}', space=vmem, size = 0x2000, scoped, tag = 'output window, operand 0, single buffered']
    %6 = vsyncpa [#allocation3], 0
    %7 = vsyncpa [#allocation4], 0
    // Predicated region
    $region2: #{tpu_custom_call.1} parent=1 // pred_check
      _
    $region3: #{tpu_custom_call.1} parent=1 // pred_check_branch
      %9 = sbr.rel (0) target = $region5
    $region4: #{tpu_custom_call.1} parent=1 // pred_region
      %s11 = ssub.s32 256, 256
      %12 = vsyncadd [#allocation3], %s11
      %s14 = sshll.u32 [#allocation2], 4
      %s15 = int_to_ptr.vmem [resolvable:$true] %s14
      %17 = dma.hbm_to_vmem [thread:$0]  %s0, 256, %s15, [#allocation3]
    $region5: #{tpu_custom_call.1} parent=1 // pred_fallthru
      _
    // Predicated region
    $region6: #{tpu_custom_call.1} parent=1 // pred_check
      _
    $region7: #{tpu_custom_call.1} parent=1 // pred_check_branch
      %19 = sbr.rel (0) target = $region9
    $region8: #{tpu_custom_call.1} parent=1 // pred_region
      %20 = dma.done [#allocation3], 256
    $region9: #{tpu_custom_call.1} parent=1 // pred_fallthru
      _
    %v21 = vld [vmem:[#allocation2] sm:$0xff]
    %v22 = vld [vmem:[#allocation2 + $0x8] sm:$0xff]
    %v25 = vcombine.high %v21, %v21
    %v27 = vunpack.c.l.s4 1983009808
    %v28 = vunpack.c.0.s8 %v27
    %v29 = vlaneseq
    %v30 = vshrl.u32 %v29, 7
    %v31 = vsub.s32 %v28, %v30
    %v32 = vrot.slane %v21, %v31
    %v34 = vunpack.c.l.s4 1983009808
    %v35 = vunpack.c.0.s8 %v34
    %v36 = vlaneseq
    %v37 = vshrl.u32 %v36, 7
    %v38 = vsub.s32 %v35, %v37
    %v39 = vrot.slane %v25, %v38
    %v40 = vcombine.high %v32, %v32
    %v41 = vcombine.high %v39, %v39
    %v42 = vcombine.high %v22, %v22
    %v44 = vunpack.c.l.s4 1983009808
    %v45 = vunpack.c.0.s8 %v44
    %v46 = vlaneseq
    %v47 = vshrl.u32 %v46, 7
    %v48 = vsub.s32 %v45, %v47
    %v49 = vrot.slane %v22, %v48
    %v51 = vunpack.c.l.s4 1983009808
    %v52 = vunpack.c.0.s8 %v51
    %v53 = vlaneseq
    %v54 = vshrl.u32 %v53, 7
    %v55 = vsub.s32 %v52, %v54
    %v56 = vrot.slane %v42, %v55
    %v57 = vcombine.high %v49, %v49
    %v58 = vcombine.high %v56, %v56
    %vm67 = vcmask 1041408
    %v68 = vsel %vm67, %v32, 0.0
    %v69 = vsel %vm67, %v40, 0.0
    %v70 = vadd.f32 %v68, %v69
    %v71 = vsel %vm67, %v39, 0.0
    %v72 = vadd.f32 %v70, %v71
    %v73 = vsel %vm67, %v41, 0.0
    %v74 = vadd.f32 %v72, %v73
    %v75 = vsel %vm67, %v49, 0.0
    %v76 = vadd.f32 %v74, %v75
    %v77 = vsel %vm67, %v57, 0.0
    %v78 = vadd.f32 %v76, %v77
    %v79 = vsel %vm67, %v56, 0.0
    %v80 = vadd.f32 %v78, %v79
    %v81 = vsel %vm67, %v58, 0.0
    %v82 = vadd.f32 %v80, %v81
    %83 = vadd.xlane.f32.xlu0 %v82
    %v84 = vpop.xlane.xlu0 %83
    %v85 = vmul.f32 %v21, %v21
    %v86 = vmul.f32 %v22, %v22
    %v89 = vcombine.high %v85, %v85
    %v91 = vunpack.c.l.s4 1983009808
    %v92 = vunpack.c.0.s8 %v91
    %v93 = vlaneseq
    %v94 = vshrl.u32 %v93, 7
    %v95 = vsub.s32 %v92, %v94
    %v96 = vrot.slane %v85, %v95
    %v98 = vunpack.c.l.s4 1983009808
    %v99 = vunpack.c.0.s8 %v98
    %v100 = vlaneseq
    %v101 = vshrl.u32 %v100, 7
    %v102 = vsub.s32 %v99, %v101
    %v103 = vrot.slane %v89, %v102
    %v104 = vcombine.high %v96, %v96
    %v105 = vcombine.high %v103, %v103
    %v106 = vcombine.high %v86, %v86
    %v108 = vunpack.c.l.s4 1983009808
    %v109 = vunpack.c.0.s8 %v108
    %v110 = vlaneseq
    %v111 = vshrl.u32 %v110, 7
    %v112 = vsub.s32 %v109, %v111
    %v113 = vrot.slane %v86, %v112
    %v115 = vunpack.c.l.s4 1983009808
    %v116 = vunpack.c.0.s8 %v115
    %v117 = vlaneseq
    %v118 = vshrl.u32 %v117, 7
    %v119 = vsub.s32 %v116, %v118
    %v120 = vrot.slane %v106, %v119
    %v121 = vcombine.high %v113, %v113
    %v122 = vcombine.high %v120, %v120
    %v131 = vsel %vm67, %v96, 0.0
    %v132 = vsel %vm67, %v104, 0.0
    %v133 = vadd.f32 %v131, %v132
    %v134 = vsel %vm67, %v103, 0.0
    %v135 = vadd.f32 %v133, %v134
    %v136 = vsel %vm67, %v105, 0.0
    %v137 = vadd.f32 %v135, %v136
    %v138 = vsel %vm67, %v113, 0.0
    %v139 = vadd.f32 %v137, %v138
    %v140 = vsel %vm67, %v121, 0.0
    %v141 = vadd.f32 %v139, %v140
    %v142 = vsel %vm67, %v120, 0.0
    %v143 = vadd.f32 %v141, %v142
    %v144 = vsel %vm67, %v122, 0.0
    %v145 = vadd.f32 %v143, %v144
    %146 = vadd.xlane.f32.xlu0 %v145
    %v147 = vpop.xlane.xlu0 %146
    %v148 = vmul.f32 %v84, 0.0009765625
    %v149 = vmul.f32 %v148, 1024.0
    %v150 = vmul.f32 %v149, %v148
    %v151 = vsub.f32 %v147, %v150
    %v152 = vmul.f32 %v151, 0.0009775171
    %v153 = vmax.f32 %v152, 0.0
    %v154 = vrsqrt.pop %v153
    %v155 = vmul.f32 %v153, %v154
    %vm156 = vcmp.eq.f32.partialorder %v153, inf
    %v157 = vsel %vm156, %v153, %v155
    %vm158 = vcmp.eq.f32.partialorder %v153, 0.0
    %v159 = vand.u32 %v153, 2147483648
    %v160 = vsel %vm158, %v159, %v157
    %v161 = vadd.f32 %v160, 1e-08
    %v162 = vrcp.pop %v161
    %v165 = vunpack.c.l.s4 269488144
    %v166 = vunpack.c.0.s8 %v165
    %v167 = vlaneseq
    %v168 = vshrl.u32 %v167, 7
    %v169 = vsub.s32 %v166, %v168
    %v170 = vrot.slane %v148, %v169
    %v172 = vsub.f32 %v21, %v170
    %v173 = vsub.f32 %v22, %v170
    %v176 = vunpack.c.l.s4 269488144
    %v177 = vunpack.c.0.s8 %v176
    %v178 = vlaneseq
    %v179 = vshrl.u32 %v178, 7
    %v180 = vsub.s32 %v177, %v179
    %v181 = vrot.slane %v162, %v180
    %v183 = vmul.f32 %v172, %v181
    %v184 = vmul.f32 %v173, %v181
    %185 = vst [vmem:[#allocation5] sm:$0xff] %v183
    %186 = vst [vmem:[#allocation5 + $0x8] sm:$0xff] %v184
    // Predicated region
    $region10: #{tpu_custom_call.1} parent=1 // pred_check
      _
    $region11: #{tpu_custom_call.1} parent=1 // pred_check_branch
      %188 = sbr.rel (0) target = $region13
    $region12: #{tpu_custom_call.1} parent=1 // pred_region
      %s190 = ssub.s32 256, 256
      %191 = vsyncadd [#allocation4], %s190
      %s193 = sshll.u32 [#allocation5], 4
      %s194 = int_to_ptr.vmem [resolvable:$true] %s193
      %196 = dma.vmem_to_hbm [thread:$0]  %s194, 256, %s1, [#allocation4]
    $region13: #{tpu_custom_call.1} parent=1 // pred_fallthru
      _
    // Predicated region
    $region14: #{tpu_custom_call.1} parent=1 // pred_check
      _
    $region15: #{tpu_custom_call.1} parent=1 // pred_check_branch
      %198 = sbr.rel (0) target = $region17
    $region16: #{tpu_custom_call.1} parent=1 // pred_region
      %199 = dma.done [#allocation4], 256
    $region17: #{tpu_custom_call.1} parent=1 // pred_fallthru
      _
    %200 = vsyncpa [#allocation3], 1
    %201 = vsyncpa [#allocation4], 1

</llo_original>
